<compile_context>
chip_gen: v6e
topology: v6e:2x2x1
jax: 0.10.0
libtpu: 0.0.40
codegen_flags: <defaults>
</compile_context>

<pallas_src>
import math
import jax
import jax.numpy as jnp
from jax.experimental import pallas as pl
from jax.experimental.pallas import tpu as pltpu

LAYER_DIMS = [9, 100, 50, 20, 10, 1]
NUM_LAYERS = len(LAYER_DIMS) - 1
PAD = 128          # lane width: every layer width is zero-padded to 128
BIAS_ROWS = 8      # sublane-aligned bias slab (rows 0..4 used)


def mlp_kernel(x_ref, w_ref, b_ref, o_ref):
    """x_ref: (TB, 128) zero-padded input tile (features 9 -> 128).
       w_ref: (NUM_LAYERS*128, 128) packed zero-padded weight slab (resident).
       b_ref: (8, 128) packed bias slab, row l = layer-l bias (resident).
       o_ref: (TB, 128) lane-dense output tile; column 0 holds sigmoid(logit)."""
    h = x_ref[...]
    for l in range(NUM_LAYERS):
        w = w_ref[pl.ds(l * PAD, PAD), :]          # static slice of VMEM slab: free
        z = jnp.dot(h, w, preferred_element_type=jnp.float32) + b_ref[pl.ds(l, 1), :]
        if l < NUM_LAYERS - 1:
            h = jnp.maximum(z, 0.0)                # VPU ReLU on full, unmasked vregs
        else:
            # Numerically stable sigmoid via tanh (EUP slot, idle otherwise).
            o_ref[...] = 0.5 * (jnp.tanh(0.5 * z) + 1.0)


def _round_up(n, m):
    return ((n + m - 1) // m) * m


def pack_params(params):
    """Pack [(w:(in,out), b:(1,out))]*5 into one weight slab and one bias slab."""
    w_slab = jnp.zeros((NUM_LAYERS * PAD, PAD), jnp.float32)
    b_slab = jnp.zeros((BIAS_ROWS, PAD), jnp.float32)
    for l, (w, b) in enumerate(params):
        fi, fo = w.shape
        w_slab = w_slab.at[l * PAD:l * PAD + fi, :fo].set(w)
        b_slab = b_slab.at[l, :fo].set(jnp.reshape(b, (-1,)))
    return w_slab, b_slab


def net_forward(x, w_slab, b_slab, *, tile_b=512):
    """x: (B, 9) float32 -> (B, 1) float32 sigmoid output."""
    B = x.shape[0]
    tb = min(tile_b, _round_up(B, 8))
    b_pad = _round_up(B, tb)

    # Zero-pad batch to a tile multiple and features 9 -> 128 (lane-dense input).
    xp = jnp.zeros((b_pad, PAD), jnp.float32).at[:B, :LAYER_DIMS[0]].set(x)

    out = pl.pallas_call(
        mlp_kernel,
        out_shape=jax.ShapeDtypeStruct((b_pad, PAD), jnp.float32),
        grid=(b_pad // tb,),
        in_specs=[
            pl.BlockSpec((tb, PAD), lambda i: (i, 0)),                 # x: pipelined
            pl.BlockSpec((NUM_LAYERS * PAD, PAD), lambda i: (0, 0)),   # weights: resident
            pl.BlockSpec((BIAS_ROWS, PAD), lambda i: (0, 0)),          # biases: resident
        ],
        out_specs=pl.BlockSpec((tb, PAD), lambda i: (i, 0)),           # lane-dense store
        compiler_params=pltpu.CompilerParams(
            dimension_semantics=("parallel",)),   # 2 TCs on v7x; no-op on v5e/v6e
    )(xp, w_slab, b_slab)
    return out[:B, :1]


def xavier_uniform(key, fan_in, fan_out):
    # Matches torch.nn.init.xavier_uniform_ (gain=1).
    a = math.sqrt(6.0 / (fan_in + fan_out))
    return jax.random.uniform(key, (fan_in, fan_out), jnp.float32, -a, a)


def init_params(key):
    params = []
    for i in range(NUM_LAYERS):
        key, sub = jax.random.split(key)
        fi, fo = LAYER_DIMS[i], LAYER_DIMS[i + 1]
        w = xavier_uniform(sub, fi, fo)                 # (in, out)
        b = jnp.zeros((1, fo), jnp.float32)             # bias filled with 0
        params.append((w, b))
    return params


if __name__ == "__main__":
    key = jax.random.PRNGKey(0)
    key, xkey = jax.random.split(key)

    batch = 8
    x = jax.random.normal(xkey, (batch, LAYER_DIMS[0]), jnp.float32)
    params = init_params(key)
    w_slab, b_slab = pack_params(params)

    y = net_forward(x, w_slab, b_slab)
    jax.block_until_ready(y)

    # Reference check in plain JAX (same math as the PyTorch module).
    h = x
    for i, (w, b) in enumerate(params):
        z = h @ w + b
        h = jnp.maximum(z, 0.0) if i < NUM_LAYERS - 1 else 1.0 / (1.0 + jnp.exp(-z))

    assert y.shape == (batch, 1)
    assert jnp.allclose(y, h, atol=2e-5, rtol=1e-5), float(jnp.max(jnp.abs(y - h)))

    print("KERNEL_OK")
</pallas_src>

<mosaic_0001>
module attributes {stable_mosaic.version = 11 : i64} {
  func.func @mlp_kernel(%arg0: i32, %arg1: memref<8x128xf32, #tpu.memory_space<vmem>>, %arg2: memref<640x128xf32, #tpu.memory_space<vmem>>, %arg3: memref<8x128xf32, #tpu.memory_space<vmem>>, %arg4: memref<8x128xf32, #tpu.memory_space<vmem>>) attributes {dimension_semantics = [#tpu.dimension_semantics<parallel>], iteration_bounds = array<i64: 1>, scalar_prefetch = 0 : i64, scratch_operands = 0 : i64, tpu.core_type = #tpu.core_type<tc>, window_params = [{transform_indices = @transform_0, window_bounds = array<i64: 8, 128>}, {pipeline_mode = #tpu.pipeline_mode<synchronous>, transform_indices = @transform_1, window_bounds = array<i64: 640, 128>}, {pipeline_mode = #tpu.pipeline_mode<synchronous>, transform_indices = @transform_2, window_bounds = array<i64: 8, 128>}, {transform_indices = @transform_3, window_bounds = array<i64: 8, 128>}]} {
    %c0 = arith.constant 0 : index
    %c0_0 = arith.constant 0 : index
    %0 = vector.load %arg1[%c0, %c0_0] : memref<8x128xf32, #tpu.memory_space<vmem>>, vector<8x128xf32>
    %c0_1 = arith.constant 0 : index
    %c0_2 = arith.constant 0 : index
    %1 = vector.load %arg2[%c0_1, %c0_2] : memref<640x128xf32, #tpu.memory_space<vmem>>, vector<128x128xf32>
    %cst = arith.constant dense<0.000000e+00> : vector<8x128xf32>
    %2 = tpu.matmul %0, %1, %cst {dimension_numbers = #tpu.dot_dimension_numbers<[1], [0], [0], [1], [0, 0, 1, 1], [], []>} : vector<8x128xf32>, vector<128x128xf32>, vector<8x128xf32> -> vector<8x128xf32>
    %c0_3 = arith.constant 0 : index
    %c0_4 = arith.constant 0 : index
    %3 = vector.load %arg3[%c0_3, %c0_4] : memref<8x128xf32, #tpu.memory_space<vmem>>, vector<1x128xf32>
    %4 = vector.broadcast %3 : vector<1x128xf32> to vector<8x128xf32>
    %5 = arith.addf %2, %4 : vector<8x128xf32>
    %cst_5 = arith.constant 0.000000e+00 : f32
    %6 = vector.broadcast %cst_5 : f32 to vector<8x128xf32>
    %7 = arith.maximumf %5, %6 : vector<8x128xf32>
    %c128 = arith.constant 128 : index
    %c0_6 = arith.constant 0 : index
    %8 = vector.load %arg2[%c128, %c0_6] : memref<640x128xf32, #tpu.memory_space<vmem>>, vector<128x128xf32>
    %cst_7 = arith.constant dense<0.000000e+00> : vector<8x128xf32>
    %9 = tpu.matmul %7, %8, %cst_7 {dimension_numbers = #tpu.dot_dimension_numbers<[1], [0], [0], [1], [0, 0, 1, 1], [], []>} : vector<8x128xf32>, vector<128x128xf32>, vector<8x128xf32> -> vector<8x128xf32>
    %c1 = arith.constant 1 : index
    %c0_8 = arith.constant 0 : index
    %10 = vector.load %arg3[%c1, %c0_8] : memref<8x128xf32, #tpu.memory_space<vmem>>, vector<1x128xf32>
    %11 = vector.broadcast %10 : vector<1x128xf32> to vector<8x128xf32>
    %12 = arith.addf %9, %11 : vector<8x128xf32>
    %cst_9 = arith.constant 0.000000e+00 : f32
    %13 = vector.broadcast %cst_9 : f32 to vector<8x128xf32>
    %14 = arith.maximumf %12, %13 : vector<8x128xf32>
    %c256 = arith.constant 256 : index
    %c0_10 = arith.constant 0 : index
    %15 = vector.load %arg2[%c256, %c0_10] : memref<640x128xf32, #tpu.memory_space<vmem>>, vector<128x128xf32>
    %cst_11 = arith.constant dense<0.000000e+00> : vector<8x128xf32>
    %16 = tpu.matmul %14, %15, %cst_11 {dimension_numbers = #tpu.dot_dimension_numbers<[1], [0], [0], [1], [0, 0, 1, 1], [], []>} : vector<8x128xf32>, vector<128x128xf32>, vector<8x128xf32> -> vector<8x128xf32>
    %c2 = arith.constant 2 : index
    %c0_12 = arith.constant 0 : index
    %17 = vector.load %arg3[%c2, %c0_12] : memref<8x128xf32, #tpu.memory_space<vmem>>, vector<1x128xf32>
    %18 = vector.broadcast %17 : vector<1x128xf32> to vector<8x128xf32>
    %19 = arith.addf %16, %18 : vector<8x128xf32>
    %cst_13 = arith.constant 0.000000e+00 : f32
    %20 = vector.broadcast %cst_13 : f32 to vector<8x128xf32>
    %21 = arith.maximumf %19, %20 : vector<8x128xf32>
    %c384 = arith.constant 384 : index
    %c0_14 = arith.constant 0 : index
    %22 = vector.load %arg2[%c384, %c0_14] : memref<640x128xf32, #tpu.memory_space<vmem>>, vector<128x128xf32>
    %cst_15 = arith.constant dense<0.000000e+00> : vector<8x128xf32>
    %23 = tpu.matmul %21, %22, %cst_15 {dimension_numbers = #tpu.dot_dimension_numbers<[1], [0], [0], [1], [0, 0, 1, 1], [], []>} : vector<8x128xf32>, vector<128x128xf32>, vector<8x128xf32> -> vector<8x128xf32>
    %c3 = arith.constant 3 : index
    %c0_16 = arith.constant 0 : index
    %24 = vector.load %arg3[%c3, %c0_16] : memref<8x128xf32, #tpu.memory_space<vmem>>, vector<1x128xf32>
    %25 = vector.broadcast %24 : vector<1x128xf32> to vector<8x128xf32>
    %26 = arith.addf %23, %25 : vector<8x128xf32>
    %cst_17 = arith.constant 0.000000e+00 : f32
    %27 = vector.broadcast %cst_17 : f32 to vector<8x128xf32>
    %28 = arith.maximumf %26, %27 : vector<8x128xf32>
    %c512 = arith.constant 512 : index
    %c0_18 = arith.constant 0 : index
    %29 = vector.load %arg2[%c512, %c0_18] : memref<640x128xf32, #tpu.memory_space<vmem>>, vector<128x128xf32>
    %cst_19 = arith.constant dense<0.000000e+00> : vector<8x128xf32>
    %30 = tpu.matmul %28, %29, %cst_19 {dimension_numbers = #tpu.dot_dimension_numbers<[1], [0], [0], [1], [0, 0, 1, 1], [], []>} : vector<8x128xf32>, vector<128x128xf32>, vector<8x128xf32> -> vector<8x128xf32>
    %c4 = arith.constant 4 : index
    %c0_20 = arith.constant 0 : index
    %31 = vector.load %arg3[%c4, %c0_20] : memref<8x128xf32, #tpu.memory_space<vmem>>, vector<1x128xf32>
    %32 = vector.broadcast %31 : vector<1x128xf32> to vector<8x128xf32>
    %33 = arith.addf %30, %32 : vector<8x128xf32>
    %cst_21 = arith.constant 5.000000e-01 : f32
    %34 = vector.broadcast %cst_21 : f32 to vector<8x128xf32>
    %35 = arith.mulf %34, %33 : vector<8x128xf32>
    %36 = math.tanh %35 : vector<8x128xf32>
    %cst_22 = arith.constant 1.000000e+00 : f32
    %37 = vector.broadcast %cst_22 : f32 to vector<8x128xf32>
    %38 = arith.addf %36, %37 : vector<8x128xf32>
    %cst_23 = arith.constant 5.000000e-01 : f32
    %39 = vector.broadcast %cst_23 : f32 to vector<8x128xf32>
    %40 = arith.mulf %39, %38 : vector<8x128xf32>
    %c0_24 = arith.constant 0 : index
    %c0_25 = arith.constant 0 : index
    %41 = vector.load %arg4[%c0_24, %c0_25] : memref<8x128xf32, #tpu.memory_space<vmem>>, vector<8x128xf32>
    tpu.vector_store %arg4[%c0_24, %c0_25], %40 {strides = array<i32>} : memref<8x128xf32, #tpu.memory_space<vmem>>, vector<8x128xf32>,
    return
  }
  func.func @transform_0(%arg0: i32) -> (i32, i32) {
    %c0_i32 = arith.constant 0 : i32
    %c0_i32_0 = arith.constant 0 : i32
    return %arg0, %c0_i32 : i32, i32
  }
  func.func @transform_1(%arg0: i32) -> (i32, i32) {
    %c0_i32 = arith.constant 0 : i32
    %c0_i32_0 = arith.constant 0 : i32
    %c0_i32_1 = arith.constant 0 : i32
    return %c0_i32, %c0_i32_0 : i32, i32
  }
  func.func @transform_2(%arg0: i32) -> (i32, i32) {
    %c0_i32 = arith.constant 0 : i32
    %c0_i32_0 = arith.constant 0 : i32
    %c0_i32_1 = arith.constant 0 : i32
    return %c0_i32, %c0_i32_0 : i32, i32
  }
  func.func @transform_3(%arg0: i32) -> (i32, i32) {
    %c0_i32 = arith.constant 0 : i32
    %c0_i32_0 = arith.constant 0 : i32
    return %arg0, %c0_i32 : i32, i32
  }
}

</mosaic_0001>

<llo_original>
// kernel: tpu_custom_call.1
$region0: #{tpu_custom_call.1}
  #allocation0 [shape = 'u32[]', space=smem, size = 0x4, offset = 0x4, fixed_abs, tag = 'smem constant byte address 0x4 - core index']
  #allocation1 [shape = 'u32[144,128]{1,0:T(1,128)}', space=vmem, size = 0x12000, scoped, tag = 'internal scratch']
  %s0 = inlined_call_operand.hbm [shape: f32[8,128], index: 0, kind: input, shape index: {}]
  %s1 = inlined_call_operand.hbm [shape: f32[640,128], index: 1, kind: input, shape index: {}]
  %s2 = inlined_call_operand.hbm [shape: f32[8,128], index: 2, kind: input, shape index: {}]
  %s3 = inlined_call_operand.hbm [shape: f32[8,128], index: 3, kind: output, shape index: {}]
  %s4 = sld [smem:[#allocation0]]
  $region34: #{tpu_custom_call.1} parent=0
    _
  %s6 = ssub.s32 1, %s4
  %s7 = scalar_select 0, %s6, %s4
  $region1: #{tpu_custom_call.1} parent=0
    #allocation2 [shape = 'u8[4096]{0}', space=vmem, size = 0x1000, scoped, tag = 'input window, operand 0, single buffered']
    #allocation3 [shape = 's32[1]{0}', space=sflag, size = 0x4, scoped, tag = 'scoped memory for tpu_custom_call.1']
    #allocation4 [shape = 's32[1]{0}', space=sflag, size = 0x4, scoped, tag = 'scoped memory for tpu_custom_call.1']
    #allocation5 [shape = 'u8[327680]{0}', space=vmem, size = 0x50000, scoped, tag = 'input window, operand 1, single buffered']
    #allocation6 [shape = 's32[1]{0}', space=sflag, size = 0x4, scoped, tag = 'scoped memory for tpu_custom_call.1']
    #allocation7 [shape = 'u8[4096]{0}', space=vmem, size = 0x1000, scoped, tag = 'input window, operand 2, single buffered']
    #allocation8 [shape = 'u8[4096]{0}', space=vmem, size = 0x1000, scoped, tag = 'output window, operand 0, single buffered']
    %8 = vsyncpa [#allocation3], 0
    %9 = vsyncpa [#allocation6], 0
    %10 = vsyncpa [#allocation4], 0
    // Predicated region
    $region2: #{tpu_custom_call.1} parent=1 // pred_check
      _
    $region3: #{tpu_custom_call.1} parent=1 // pred_check_branch
      %12 = sbr.rel (0) target = $region5
    $region4: #{tpu_custom_call.1} parent=1 // pred_region
      %s14 = ssub.s32 128, 128
      %15 = vsyncadd [#allocation3], %s14
      %s17 = sshll.u32 [#allocation2], 4
      %s18 = int_to_ptr.vmem [resolvable:$true] %s17
      %20 = dma.hbm_to_vmem [thread:$0]  %s0, 128, %s18, [#allocation3]
    $region5: #{tpu_custom_call.1} parent=1 // pred_fallthru
      _
    // Predicated region
    $region6: #{tpu_custom_call.1} parent=1 // pred_check
      _
    $region7: #{tpu_custom_call.1} parent=1 // pred_check_branch
      %22 = sbr.rel (0) target = $region9
    $region8: #{tpu_custom_call.1} parent=1 // pred_region
      %s24 = ssub.s32 10240, 10240
      %25 = vsyncadd [#allocation6], %s24
      %s26 = sshll.u32 [#allocation5], 4
      %s27 = int_to_ptr.vmem [resolvable:$true] %s26
      %32 = dma.hbm_to_vmem [thread:$0]  %s1, 10240, %s27, [#allocation6], 128, 128, 8
    $region9: #{tpu_custom_call.1} parent=1 // pred_fallthru
      _
    // Predicated region
    $region10: #{tpu_custom_call.1} parent=1 // pred_check
      _
    $region11: #{tpu_custom_call.1} parent=1 // pred_check_branch
      %34 = sbr.rel (0) target = $region13
    $region12: #{tpu_custom_call.1} parent=1 // pred_region
      %s36 = ssub.s32 128, 128
      %37 = vsyncadd [#allocation6], %s36
      %s39 = sshll.u32 [#allocation7], 4
      %s40 = int_to_ptr.vmem [resolvable:$true] %s39
      %42 = dma.hbm_to_vmem [thread:$0]  %s2, 128, %s40, [#allocation6]
    $region13: #{tpu_custom_call.1} parent=1 // pred_fallthru
      _
    // Predicated region
    $region14: #{tpu_custom_call.1} parent=1 // pred_check
      _
    $region15: #{tpu_custom_call.1} parent=1 // pred_check_branch
      %44 = sbr.rel (0) target = $region17
    $region16: #{tpu_custom_call.1} parent=1 // pred_region
      %45 = dma.done [#allocation3], 128
    $region17: #{tpu_custom_call.1} parent=1 // pred_fallthru
      _
    // Predicated region
    $region18: #{tpu_custom_call.1} parent=1 // pred_check
      _
    $region19: #{tpu_custom_call.1} parent=1 // pred_check_branch
      %47 = sbr.rel (0) target = $region21
    $region20: #{tpu_custom_call.1} parent=1 // pred_region
      %48 = dma.done [#allocation6], 10240
    $region21: #{tpu_custom_call.1} parent=1 // pred_fallthru
      _
    // Predicated region
    $region22: #{tpu_custom_call.1} parent=1 // pred_check
      _
    $region23: #{tpu_custom_call.1} parent=1 // pred_check_branch
      %50 = sbr.rel (0) target = $region25
    $region24: #{tpu_custom_call.1} parent=1 // pred_region
      %51 = dma.done [#allocation6], 128
    $region25: #{tpu_custom_call.1} parent=1 // pred_fallthru
      _
    %v52 = vld [vmem:[#allocation2] sm:$0xff]
    %v53 = vld [vmem:[#allocation5] sm:$0xff]
    %v54 = vld [vmem:[#allocation5 + $0x8] sm:$0xff]
    %v55 = vld [vmem:[#allocation5 + $0x10] sm:$0xff]
    %v56 = vld [vmem:[#allocation5 + $0x18] sm:$0xff]
    %v57 = vld [vmem:[#allocation5 + $0x20] sm:$0xff]
    %v58 = vld [vmem:[#allocation5 + $0x28] sm:$0xff]
    %v59 = vld [vmem:[#allocation5 + $0x30] sm:$0xff]
    %v60 = vld [vmem:[#allocation5 + $0x38] sm:$0xff]
    %v61 = vld [vmem:[#allocation5 + $0x40] sm:$0xff]
    %v62 = vld [vmem:[#allocation5 + $0x48] sm:$0xff]
    %v63 = vld [vmem:[#allocation5 + $0x50] sm:$0xff]
    %v64 = vld [vmem:[#allocation5 + $0x58] sm:$0xff]
    %v65 = vld [vmem:[#allocation5 + $0x60] sm:$0xff]
    %v66 = vld [vmem:[#allocation5 + $0x68] sm:$0xff]
    %v67 = vld [vmem:[#allocation5 + $0x70] sm:$0xff]
    %v68 = vld [vmem:[#allocation5 + $0x78] sm:$0xff]
    %v69 = vld [vmem:[#allocation7] sm:$0x1]
    %v70 = vlaneseq
    %v71 = vshrl.u32 %v70, 7
    %v72 = vsub.s32 0, %v71
    %v73 = vrot.slane %v69, %v72
    %74 = vmatprep.subr.mxu0 0.0
    %75 = vmatpush1.msra.mxu0 %v68
    %76 = vmatprep.subr.mxu0 0.0
    %77 = vmatpush1.msra.mxu0 %v67
    %78 = vmatprep.subr.mxu0 0.0
    %79 = vmatpush1.msra.mxu0 %v66
    %80 = vmatprep.subr.mxu0 0.0
    %81 = vmatpush1.msra.mxu0 %v65
    %82 = vmatprep.subr.mxu0 0.0
    %83 = vmatpush1.msra.mxu0 %v64
    %84 = vmatprep.subr.mxu0 0.0
    %85 = vmatpush1.msra.mxu0 %v63
    %86 = vmatprep.subr.mxu0 0.0
    %87 = vmatpush1.msra.mxu0 %v62
    %88 = vmatprep.subr.mxu0 0.0
    %89 = vmatpush1.msra.mxu0 %v61
    %90 = vmatprep.subr.mxu0 0.0
    %91 = vmatpush1.msra.mxu0 %v60
    %92 = vmatprep.subr.mxu0 0.0
    %93 = vmatpush1.msra.mxu0 %v59
    %94 = vmatprep.subr.mxu0 0.0
    %95 = vmatpush1.msra.mxu0 %v58
    %96 = vmatprep.subr.mxu0 0.0
    %97 = vmatpush1.msra.mxu0 %v57
    %98 = vmatprep.subr.mxu0 0.0
    %99 = vmatpush1.msra.mxu0 %v56
    %100 = vmatprep.subr.mxu0 0.0
    %101 = vmatpush1.msra.mxu0 %v55
    %102 = vmatprep.subr.mxu0 0.0
    %103 = vmatpush1.msra.mxu0 %v54
    %104 = vmatprep.subr.mxu0 0.0
    %105 = vmatpush1.msra.mxu0 %v53
    %106 = vmatprep.subr.mxu0 0.0
    %107 = vmatpush2.msra.mxu0 0.0
    %108 = vmatprep.subr.mxu0 0.0
    %109 = vmatpush2.msra.mxu0 0.0
    %110 = vmatprep.subr.mxu0 0.0
    %111 = vmatpush2.msra.mxu0 0.0
    %112 = vmatprep.subr.mxu0 0.0
    %113 = vmatpush2.msra.mxu0 0.0
    %114 = vmatprep.subr.mxu0 0.0
    %115 = vmatpush2.msra.mxu0 0.0
    %116 = vmatprep.subr.mxu0 0.0
    %117 = vmatpush2.msra.mxu0 0.0
    %118 = vmatprep.subr.mxu0 0.0
    %119 = vmatpush2.msra.mxu0 0.0
    %120 = vmatprep.subr.mxu0 0.0
    %121 = vmatpush2.msra.mxu0 0.0
    %122 = vmatprep.subr.mxu0 0.0
    %123 = vmatpush2.msra.mxu0 0.0
    %124 = vmatprep.subr.mxu0 0.0
    %125 = vmatpush2.msra.mxu0 0.0
    %126 = vmatprep.subr.mxu0 0.0
    %127 = vmatpush2.msra.mxu0 0.0
    %128 = vmatprep.subr.mxu0 0.0
    %129 = vmatpush2.msra.mxu0 0.0
    %130 = vmatprep.subr.mxu0 0.0
    %131 = vmatpush2.msra.mxu0 0.0
    %132 = vmatprep.subr.mxu0 0.0
    %133 = vmatpush2.msra.mxu0 0.0
    %134 = vmatprep.subr.mxu0 0.0
    %135 = vmatpush2.msra.mxu0 0.0
    %136 = vmatprep.subr.mxu0 0.0
    %137 = vmatpush2.msra.mxu0 0.0
    %138 = vmatprep.mubr.f32.mxu0 0.0
    %139 = vmatmul.mubr.f32.gmra.mxu0 %v52
    %v140 = vpop.f32.mrf.mxu0
    %v141 = vadd.f32 %v73, %v140
    %v142 = vpop.f32.mrf.mxu0
    %143 = vdwg.mxu0
    %v144 = vmax.f32 %v141, 0.0
    %v145 = vld [vmem:[#allocation5 + $0x80] sm:$0xff]
    %v146 = vld [vmem:[#allocation5 + $0x88] sm:$0xff]
    %v147 = vld [vmem:[#allocation5 + $0x90] sm:$0xff]
    %v148 = vld [vmem:[#allocation5 + $0x98] sm:$0xff]
    %v149 = vld [vmem:[#allocation5 + $0xa0] sm:$0xff]
    %v150 = vld [vmem:[#allocation5 + $0xa8] sm:$0xff]
    %v151 = vld [vmem:[#allocation5 + $0xb0] sm:$0xff]
    %v152 = vld [vmem:[#allocation5 + $0xb8] sm:$0xff]
    %v153 = vld [vmem:[#allocation5 + $0xc0] sm:$0xff]
    %v154 = vld [vmem:[#allocation5 + $0xc8] sm:$0xff]
    %v155 = vld [vmem:[#allocation5 + $0xd0] sm:$0xff]
    %v156 = vld [vmem:[#allocation5 + $0xd8] sm:$0xff]
    %v157 = vld [vmem:[#allocation5 + $0xe0] sm:$0xff]
    %v158 = vld [vmem:[#allocation5 + $0xe8] sm:$0xff]
    %v159 = vld [vmem:[#allocation5 + $0xf0] sm:$0xff]
    %v160 = vld [vmem:[#allocation5 + $0xf8] sm:$0xff]
    %v161 = vld [vmem:[#allocation7 + $0x1] sm:$0x1]
    %v162 = vlaneseq
    %v163 = vshrl.u32 %v162, 7
    %v164 = vsub.s32 0, %v163
    %v165 = vrot.slane %v161, %v164
    %166 = vmatprep.subr.mxu0 0.0
    %167 = vmatpush1.msra.mxu0 %v160
    %168 = vmatprep.subr.mxu0 0.0
    %169 = vmatpush1.msra.mxu0 %v159
    %170 = vmatprep.subr.mxu0 0.0
    %171 = vmatpush1.msra.mxu0 %v158
    %172 = vmatprep.subr.mxu0 0.0
    %173 = vmatpush1.msra.mxu0 %v157
    %174 = vmatprep.subr.mxu0 0.0
    %175 = vmatpush1.msra.mxu0 %v156
    %176 = vmatprep.subr.mxu0 0.0
    %177 = vmatpush1.msra.mxu0 %v155
    %178 = vmatprep.subr.mxu0 0.0
    %179 = vmatpush1.msra.mxu0 %v154
    %180 = vmatprep.subr.mxu0 0.0
    %181 = vmatpush1.msra.mxu0 %v153
    %182 = vmatprep.subr.mxu0 0.0
    %183 = vmatpush1.msra.mxu0 %v152
    %184 = vmatprep.subr.mxu0 0.0
    %185 = vmatpush1.msra.mxu0 %v151
    %186 = vmatprep.subr.mxu0 0.0
    %187 = vmatpush1.msra.mxu0 %v150
    %188 = vmatprep.subr.mxu0 0.0
    %189 = vmatpush1.msra.mxu0 %v149
    %190 = vmatprep.subr.mxu0 0.0
    %191 = vmatpush1.msra.mxu0 %v148
    %192 = vmatprep.subr.mxu0 0.0
    %193 = vmatpush1.msra.mxu0 %v147
    %194 = vmatprep.subr.mxu0 0.0
    %195 = vmatpush1.msra.mxu0 %v146
    %196 = vmatprep.subr.mxu0 0.0
    %197 = vmatpush1.msra.mxu0 %v145
    %198 = vmatprep.subr.mxu0 0.0
    %199 = vmatpush2.msra.mxu0 0.0
    %200 = vmatprep.subr.mxu0 0.0
    %201 = vmatpush2.msra.mxu0 0.0
    %202 = vmatprep.subr.mxu0 0.0
    %203 = vmatpush2.msra.mxu0 0.0
    %204 = vmatprep.subr.mxu0 0.0
    %205 = vmatpush2.msra.mxu0 0.0
    %206 = vmatprep.subr.mxu0 0.0
    %207 = vmatpush2.msra.mxu0 0.0
    %208 = vmatprep.subr.mxu0 0.0
    %209 = vmatpush2.msra.mxu0 0.0
    %210 = vmatprep.subr.mxu0 0.0
    %211 = vmatpush2.msra.mxu0 0.0
    %212 = vmatprep.subr.mxu0 0.0
    %213 = vmatpush2.msra.mxu0 0.0
    %214 = vmatprep.subr.mxu0 0.0
    %215 = vmatpush2.msra.mxu0 0.0
    %216 = vmatprep.subr.mxu0 0.0
    %217 = vmatpush2.msra.mxu0 0.0
    %218 = vmatprep.subr.mxu0 0.0
    %219 = vmatpush2.msra.mxu0 0.0
    %220 = vmatprep.subr.mxu0 0.0
    %221 = vmatpush2.msra.mxu0 0.0
    %222 = vmatprep.subr.mxu0 0.0
    %223 = vmatpush2.msra.mxu0 0.0
    %224 = vmatprep.subr.mxu0 0.0
    %225 = vmatpush2.msra.mxu0 0.0
    %226 = vmatprep.subr.mxu0 0.0
    %227 = vmatpush2.msra.mxu0 0.0
    %228 = vmatprep.subr.mxu0 0.0
    %229 = vmatpush2.msra.mxu0 0.0
    %230 = vmatprep.mubr.f32.mxu0 0.0
    %231 = vmatmul.mubr.f32.gmra.mxu0 %v144
    %v232 = vpop.f32.mrf.mxu0
    %v233 = vadd.f32 %v165, %v232
    %v234 = vpop.f32.mrf.mxu0
    %235 = vdwg.mxu0
    %v236 = vmax.f32 %v233, 0.0
    %v237 = vld [vmem:[#allocation5 + $0x100] sm:$0xff]
    %v238 = vld [vmem:[#allocation5 + $0x108] sm:$0xff]
    %v239 = vld [vmem:[#allocation5 + $0x110] sm:$0xff]
    %v240 = vld [vmem:[#allocation5 + $0x118] sm:$0xff]
    %v241 = vld [vmem:[#allocation5 + $0x120] sm:$0xff]
    %v242 = vld [vmem:[#allocation5 + $0x128] sm:$0xff]
    %v243 = vld [vmem:[#allocation5 + $0x130] sm:$0xff]
    %v244 = vld [vmem:[#allocation5 + $0x138] sm:$0xff]
    %v245 = vld [vmem:[#allocation5 + $0x140] sm:$0xff]
    %v246 = vld [vmem:[#allocation5 + $0x148] sm:$0xff]
    %v247 = vld [vmem:[#allocation5 + $0x150] sm:$0xff]
    %v248 = vld [vmem:[#allocation5 + $0x158] sm:$0xff]
    %v249 = vld [vmem:[#allocation5 + $0x160] sm:$0xff]
    %v250 = vld [vmem:[#allocation5 + $0x168] sm:$0xff]
    %v251 = vld [vmem:[#allocation5 + $0x170] sm:$0xff]
    %v252 = vld [vmem:[#allocation5 + $0x178] sm:$0xff]
    %v253 = vld [vmem:[#allocation7 + $0x2] sm:$0x1]
    %v254 = vlaneseq
    %v255 = vshrl.u32 %v254, 7
    %v256 = vsub.s32 0, %v255
    %v257 = vrot.slane %v253, %v256
    %258 = vmatprep.subr.mxu0 0.0
    %259 = vmatpush1.msra.mxu0 %v252
    %260 = vmatprep.subr.mxu0 0.0
    %261 = vmatpush1.msra.mxu0 %v251
    %262 = vmatprep.subr.mxu0 0.0
    %263 = vmatpush1.msra.mxu0 %v250
    %264 = vmatprep.subr.mxu0 0.0
    %265 = vmatpush1.msra.mxu0 %v249
    %266 = vmatprep.subr.mxu0 0.0
    %267 = vmatpush1.msra.mxu0 %v248
    %268 = vmatprep.subr.mxu0 0.0
    %269 = vmatpush1.msra.mxu0 %v247
    %270 = vmatprep.subr.mxu0 0.0
    %271 = vmatpush1.msra.mxu0 %v246
    %272 = vmatprep.subr.mxu0 0.0
    %273 = vmatpush1.msra.mxu0 %v245
    %274 = vmatprep.subr.mxu0 0.0
    %275 = vmatpush1.msra.mxu0 %v244
    %276 = vmatprep.subr.mxu0 0.0
    %277 = vmatpush1.msra.mxu0 %v243
    %278 = vmatprep.subr.mxu0 0.0
    %279 = vmatpush1.msra.mxu0 %v242
    %280 = vmatprep.subr.mxu0 0.0
    %281 = vmatpush1.msra.mxu0 %v241
    %282 = vmatprep.subr.mxu0 0.0
    %283 = vmatpush1.msra.mxu0 %v240
    %284 = vmatprep.subr.mxu0 0.0
    %285 = vmatpush1.msra.mxu0 %v239
    %286 = vmatprep.subr.mxu0 0.0
    %287 = vmatpush1.msra.mxu0 %v238
    %288 = vmatprep.subr.mxu0 0.0
    %289 = vmatpush1.msra.mxu0 %v237
    %290 = vmatprep.subr.mxu0 0.0
    %291 = vmatpush2.msra.mxu0 0.0
    %292 = vmatprep.subr.mxu0 0.0
    %293 = vmatpush2.msra.mxu0 0.0
    %294 = vmatprep.subr.mxu0 0.0
    %295 = vmatpush2.msra.mxu0 0.0
    %296 = vmatprep.subr.mxu0 0.0
    %297 = vmatpush2.msra.mxu0 0.0
    %298 = vmatprep.subr.mxu0 0.0
    %299 = vmatpush2.msra.mxu0 0.0
    %300 = vmatprep.subr.mxu0 0.0
    %301 = vmatpush2.msra.mxu0 0.0
    %302 = vmatprep.subr.mxu0 0.0
    %303 = vmatpush2.msra.mxu0 0.0
    %304 = vmatprep.subr.mxu0 0.0
    %305 = vmatpush2.msra.mxu0 0.0
    %306 = vmatprep.subr.mxu0 0.0
    %307 = vmatpush2.msra.mxu0 0.0
    %308 = vmatprep.subr.mxu0 0.0
    %309 = vmatpush2.msra.mxu0 0.0
    %310 = vmatprep.subr.mxu0 0.0
    %311 = vmatpush2.msra.mxu0 0.0
    %312 = vmatprep.subr.mxu0 0.0
    %313 = vmatpush2.msra.mxu0 0.0
    %314 = vmatprep.subr.mxu0 0.0
    %315 = vmatpush2.msra.mxu0 0.0
    %316 = vmatprep.subr.mxu0 0.0
    %317 = vmatpush2.msra.mxu0 0.0
    %318 = vmatprep.subr.mxu0 0.0
    %319 = vmatpush2.msra.mxu0 0.0
    %320 = vmatprep.subr.mxu0 0.0
    %321 = vmatpush2.msra.mxu0 0.0
    %322 = vmatprep.mubr.f32.mxu0 0.0
    %323 = vmatmul.mubr.f32.gmra.mxu0 %v236
    %v324 = vpop.f32.mrf.mxu0
    %v325 = vadd.f32 %v257, %v324
    %v326 = vpop.f32.mrf.mxu0
    %327 = vdwg.mxu0
    %v328 = vmax.f32 %v325, 0.0
    %v329 = vld [vmem:[#allocation5 + $0x180] sm:$0xff]
    %v330 = vld [vmem:[#allocation5 + $0x188] sm:$0xff]
    %v331 = vld [vmem:[#allocation5 + $0x190] sm:$0xff]
    %v332 = vld [vmem:[#allocation5 + $0x198] sm:$0xff]
    %v333 = vld [vmem:[#allocation5 + $0x1a0] sm:$0xff]
    %v334 = vld [vmem:[#allocation5 + $0x1a8] sm:$0xff]
    %v335 = vld [vmem:[#allocation5 + $0x1b0] sm:$0xff]
    %v336 = vld [vmem:[#allocation5 + $0x1b8] sm:$0xff]
    %v337 = vld [vmem:[#allocation5 + $0x1c0] sm:$0xff]
    %v338 = vld [vmem:[#allocation5 + $0x1c8] sm:$0xff]
    %v339 = vld [vmem:[#allocation5 + $0x1d0] sm:$0xff]
    %v340 = vld [vmem:[#allocation5 + $0x1d8] sm:$0xff]
    %v341 = vld [vmem:[#allocation5 + $0x1e0] sm:$0xff]
    %v342 = vld [vmem:[#allocation5 + $0x1e8] sm:$0xff]
    %v343 = vld [vmem:[#allocation5 + $0x1f0] sm:$0xff]
    %v344 = vld [vmem:[#allocation5 + $0x1f8] sm:$0xff]
    %v345 = vld [vmem:[#allocation7 + $0x3] sm:$0x1]
    %v346 = vlaneseq
    %v347 = vshrl.u32 %v346, 7
    %v348 = vsub.s32 0, %v347
    %v349 = vrot.slane %v345, %v348
    %350 = vmatprep.subr.mxu0 0.0
    %351 = vmatpush1.msra.mxu0 %v344
    %352 = vmatprep.subr.mxu0 0.0
    %353 = vmatpush1.msra.mxu0 %v343
    %354 = vmatprep.subr.mxu0 0.0
    %355 = vmatpush1.msra.mxu0 %v342
    %356 = vmatprep.subr.mxu0 0.0
    %357 = vmatpush1.msra.mxu0 %v341
    %358 = vmatprep.subr.mxu0 0.0
    %359 = vmatpush1.msra.mxu0 %v340
    %360 = vmatprep.subr.mxu0 0.0
    %361 = vmatpush1.msra.mxu0 %v339
    %362 = vmatprep.subr.mxu0 0.0
    %363 = vmatpush1.msra.mxu0 %v338
    %364 = vmatprep.subr.mxu0 0.0
    %365 = vmatpush1.msra.mxu0 %v337
    %366 = vmatprep.subr.mxu0 0.0
    %367 = vmatpush1.msra.mxu0 %v336
    %368 = vmatprep.subr.mxu0 0.0
    %369 = vmatpush1.msra.mxu0 %v335
    %370 = vmatprep.subr.mxu0 0.0
    %371 = vmatpush1.msra.mxu0 %v334
    %372 = vmatprep.subr.mxu0 0.0
    %373 = vmatpush1.msra.mxu0 %v333
    %374 = vmatprep.subr.mxu0 0.0
    %375 = vmatpush1.msra.mxu0 %v332
    %376 = vmatprep.subr.mxu0 0.0
    %377 = vmatpush1.msra.mxu0 %v331
    %378 = vmatprep.subr.mxu0 0.0
    %379 = vmatpush1.msra.mxu0 %v330
    %380 = vmatprep.subr.mxu0 0.0
    %381 = vmatpush1.msra.mxu0 %v329
    %382 = vmatprep.subr.mxu0 0.0
    %383 = vmatpush2.msra.mxu0 0.0
    %384 = vmatprep.subr.mxu0 0.0
    %385 = vmatpush2.msra.mxu0 0.0
    %386 = vmatprep.subr.mxu0 0.0
    %387 = vmatpush2.msra.mxu0 0.0
    %388 = vmatprep.subr.mxu0 0.0
    %389 = vmatpush2.msra.mxu0 0.0
    %390 = vmatprep.subr.mxu0 0.0
    %391 = vmatpush2.msra.mxu0 0.0
    %392 = vmatprep.subr.mxu0 0.0
    %393 = vmatpush2.msra.mxu0 0.0
    %394 = vmatprep.subr.mxu0 0.0
    %395 = vmatpush2.msra.mxu0 0.0
    %396 = vmatprep.subr.mxu0 0.0
    %397 = vmatpush2.msra.mxu0 0.0
    %398 = vmatprep.subr.mxu0 0.0
    %399 = vmatpush2.msra.mxu0 0.0
    %400 = vmatprep.subr.mxu0 0.0
    %401 = vmatpush2.msra.mxu0 0.0
    %402 = vmatprep.subr.mxu0 0.0
    %403 = vmatpush2.msra.mxu0 0.0
    %404 = vmatprep.subr.mxu0 0.0
    %405 = vmatpush2.msra.mxu0 0.0
    %406 = vmatprep.subr.mxu0 0.0
    %407 = vmatpush2.msra.mxu0 0.0
    %408 = vmatprep.subr.mxu0 0.0
    %409 = vmatpush2.msra.mxu0 0.0
    %410 = vmatprep.subr.mxu0 0.0
    %411 = vmatpush2.msra.mxu0 0.0
    %412 = vmatprep.subr.mxu0 0.0
    %413 = vmatpush2.msra.mxu0 0.0
    %414 = vmatprep.mubr.f32.mxu0 0.0
    %415 = vmatmul.mubr.f32.gmra.mxu0 %v328
    %v416 = vpop.f32.mrf.mxu0
    %v417 = vadd.f32 %v349, %v416
    %v418 = vpop.f32.mrf.mxu0
    %419 = vdwg.mxu0
    %v420 = vmax.f32 %v417, 0.0
    %v421 = vld [vmem:[#allocation5 + $0x200] sm:$0xff]
    %v422 = vld [vmem:[#allocation5 + $0x208] sm:$0xff]
    %v423 = vld [vmem:[#allocation5 + $0x210] sm:$0xff]
    %v424 = vld [vmem:[#allocation5 + $0x218] sm:$0xff]
    %v425 = vld [vmem:[#allocation5 + $0x220] sm:$0xff]
    %v426 = vld [vmem:[#allocation5 + $0x228] sm:$0xff]
    %v427 = vld [vmem:[#allocation5 + $0x230] sm:$0xff]
    %v428 = vld [vmem:[#allocation5 + $0x238] sm:$0xff]
    %v429 = vld [vmem:[#allocation5 + $0x240] sm:$0xff]
    %v430 = vld [vmem:[#allocation5 + $0x248] sm:$0xff]
    %v431 = vld [vmem:[#allocation5 + $0x250] sm:$0xff]
    %v432 = vld [vmem:[#allocation5 + $0x258] sm:$0xff]
    %v433 = vld [vmem:[#allocation5 + $0x260] sm:$0xff]
    %v434 = vld [vmem:[#allocation5 + $0x268] sm:$0xff]
    %v435 = vld [vmem:[#allocation5 + $0x270] sm:$0xff]
    %v436 = vld [vmem:[#allocation5 + $0x278] sm:$0xff]
    %v437 = vld [vmem:[#allocation7 + $0x4] sm:$0x1]
    %v438 = vlaneseq
    %v439 = vshrl.u32 %v438, 7
    %v440 = vsub.s32 0, %v439
    %v441 = vrot.slane %v437, %v440
    %442 = vmatprep.subr.mxu0 0.0
    %443 = vmatpush1.msra.mxu0 %v436
    %444 = vmatprep.subr.mxu0 0.0
    %445 = vmatpush1.msra.mxu0 %v435
    %446 = vmatprep.subr.mxu0 0.0
    %447 = vmatpush1.msra.mxu0 %v434
    %448 = vmatprep.subr.mxu0 0.0
    %449 = vmatpush1.msra.mxu0 %v433
    %450 = vmatprep.subr.mxu0 0.0
    %451 = vmatpush1.msra.mxu0 %v432
    %452 = vmatprep.subr.mxu0 0.0
    %453 = vmatpush1.msra.mxu0 %v431
    %454 = vmatprep.subr.mxu0 0.0
    %455 = vmatpush1.msra.mxu0 %v430
    %456 = vmatprep.subr.mxu0 0.0
    %457 = vmatpush1.msra.mxu0 %v429
    %458 = vmatprep.subr.mxu0 0.0
    %459 = vmatpush1.msra.mxu0 %v428
    %460 = vmatprep.subr.mxu0 0.0
    %461 = vmatpush1.msra.mxu0 %v427
    %462 = vmatprep.subr.mxu0 0.0
    %463 = vmatpush1.msra.mxu0 %v426
    %464 = vmatprep.subr.mxu0 0.0
    %465 = vmatpush1.msra.mxu0 %v425
    %466 = vmatprep.subr.mxu0 0.0
    %467 = vmatpush1.msra.mxu0 %v424
    %468 = vmatprep.subr.mxu0 0.0
    %469 = vmatpush1.msra.mxu0 %v423
    %470 = vmatprep.subr.mxu0 0.0
    %471 = vmatpush1.msra.mxu0 %v422
    %472 = vmatprep.subr.mxu0 0.0
    %473 = vmatpush1.msra.mxu0 %v421
    %474 = vmatprep.subr.mxu0 0.0
    %475 = vmatpush2.msra.mxu0 0.0
    %476 = vmatprep.subr.mxu0 0.0
    %477 = vmatpush2.msra.mxu0 0.0
    %478 = vmatprep.subr.mxu0 0.0
    %479 = vmatpush2.msra.mxu0 0.0
    %480 = vmatprep.subr.mxu0 0.0
    %481 = vmatpush2.msra.mxu0 0.0
    %482 = vmatprep.subr.mxu0 0.0
    %483 = vmatpush2.msra.mxu0 0.0
    %484 = vmatprep.subr.mxu0 0.0
    %485 = vmatpush2.msra.mxu0 0.0
    %486 = vmatprep.subr.mxu0 0.0
    %487 = vmatpush2.msra.mxu0 0.0
    %488 = vmatprep.subr.mxu0 0.0
    %489 = vmatpush2.msra.mxu0 0.0
    %490 = vmatprep.subr.mxu0 0.0
    %491 = vmatpush2.msra.mxu0 0.0
    %492 = vmatprep.subr.mxu0 0.0
    %493 = vmatpush2.msra.mxu0 0.0
    %494 = vmatprep.subr.mxu0 0.0
    %495 = vmatpush2.msra.mxu0 0.0
    %496 = vmatprep.subr.mxu0 0.0
    %497 = vmatpush2.msra.mxu0 0.0
    %498 = vmatprep.subr.mxu0 0.0
    %499 = vmatpush2.msra.mxu0 0.0
    %500 = vmatprep.subr.mxu0 0.0
    %501 = vmatpush2.msra.mxu0 0.0
    %502 = vmatprep.subr.mxu0 0.0
    %503 = vmatpush2.msra.mxu0 0.0
    %504 = vmatprep.subr.mxu0 0.0
    %505 = vmatpush2.msra.mxu0 0.0
    %506 = vmatprep.mubr.f32.mxu0 0.0
    %507 = vmatmul.mubr.f32.gmra.mxu0 %v420
    %v508 = vpop.f32.mrf.mxu0
    %v509 = vadd.f32 %v441, %v508
    %v510 = vpop.f32.mrf.mxu0
    %511 = vdwg.mxu0
    %v512 = vmul.f32 %v509, 0.5
    %v513 = vtanh.pop %v512
    %v514 = vadd.f32 %v513, 1.0
    %v515 = vmul.f32 %v514, 0.5
    %516 = vst [vmem:[#allocation8] sm:$0xff] %v515
    // Predicated region
    $region26: #{tpu_custom_call.1} parent=1 // pred_check
      _
    $region27: #{tpu_custom_call.1} parent=1 // pred_check_branch
      %518 = sbr.rel (0) target = $region29
    $region28: #{tpu_custom_call.1} parent=1 // pred_region
      %s520 = ssub.s32 128, 128
      %521 = vsyncadd [#allocation4], %s520
      %s523 = sshll.u32 [#allocation8], 4
      %s524 = int_to_ptr.vmem [resolvable:$true] %s523
      %526 = dma.vmem_to_hbm [thread:$0]  %s524, 128, %s3, [#allocation4]
    $region29: #{tpu_custom_call.1} parent=1 // pred_fallthru
      _
    // Predicated region
    $region30: #{tpu_custom_call.1} parent=1 // pred_check
      _
    $region31: #{tpu_custom_call.1} parent=1 // pred_check_branch
      %528 = sbr.rel (0) target = $region33
    $region32: #{tpu_custom_call.1} parent=1 // pred_region
      %529 = dma.done [#allocation4], 128
    $region33: #{tpu_custom_call.1} parent=1 // pred_fallthru
      _
    %530 = vsyncpa [#allocation3], 1
    %531 = vsyncpa [#allocation6], 1
    %532 = vsyncpa [#allocation4], 1

</llo_original>
